<compile_context>
chip_gen: v7x
topology: tpu7x:2x2x1
jax: 0.10.0
libtpu: 0.0.40
codegen_flags: <defaults>
</compile_context>

<pallas_src>
import functools

import jax
import jax.numpy as jnp
from jax import lax
from jax.experimental import pallas as pl
from jax.experimental.pallas import tpu as pltpu


def _morph_kernel(w_ref, b_ref, x_ref, o_ref, *, rc):
    """1x1 conv over one (C, TR, 128) pixel tile.

    w_ref: (out_ch, C) f32 in SMEM (scalar reads)
    b_ref: (out_ch,)   f32 in SMEM (scalar reads)
    x_ref: (C, TR, 128)      f32 VMEM tile -- pixels on sublanes + lanes
    o_ref: (out_ch, TR, 128) f32 VMEM tile -- full-width lane-dense stores
    """
    C, TR, _ = x_ref.shape          # static Python ints
    out_ch = o_ref.shape[0]

    def chunk(r0, rows):
        # Load each channel slice once; keep only (1 load + out_ch accumulators)
        # of (rows, 128) f32 live -> fits comfortably in the vreg file.
        x0 = x_ref[0, pl.ds(r0, rows), :]
        accs = [x0 * w_ref[o, 0] + b_ref[o] for o in range(out_ch)]
        for c in range(1, C):
            xc = x_ref[c, pl.ds(r0, rows), :]
            for o in range(out_ch):
                accs[o] = accs[o] + xc * w_ref[o, c]
        for o in range(out_ch):
            o_ref[o, pl.ds(r0, rows), :] = accs[o].astype(o_ref.dtype)

    n_full = TR // rc
    if n_full > 0:
        def body(j, carry):
            chunk(pl.multiple_of(j * rc, rc), rc)
            return carry
        lax.fori_loop(0, n_full, body, 0)

    rem = TR - n_full * rc
    if rem > 0:                      # static tail (TR, rc are Python ints)
        chunk(n_full * rc, rem)


def _round_up(x, m):
    return ((x + m - 1) // m) * m


def _choose_rows_per_tile(r_total, c, out_ch, n, budget_bytes):
    # Double-buffered f32 bytes per pixel-row (128 pixels): in + out blocks.
    per_row = 2 * (c + out_ch) * 128 * 4
    tr = max(8, (budget_bytes // per_row) // 8 * 8)
    if n == 1 and r_total >= 16:
        # Guarantee >= 2 pixel tiles so both v7x TensorCores get work.
        tr = min(tr, _round_up(pl.cdiv(r_total, 2), 8))
    # Full-extent block is always layout-legal; otherwise tr is a multiple of 8.
    return r_total if tr >= r_total else tr


def morphing_conv2d(x_nchw, weight, bias, *, vmem_budget_bytes=12 * 1024 * 1024):
    """1x1 conv (input_depth -> 2), equivalent to nn.Conv2d(input_depth, 2, 1).

    x_nchw: (N, C, H, W) float32
    weight: (2, C, 1, 1) float32  (PyTorch conv weight layout)
    bias:   (2,)         float32
    returns morph_map in NCHW: (N, 2, H, W)
    """
    N, C, H, W = x_nchw.shape
    out_ch = weight.shape[0]
    P = H * W
    P_pad = _round_up(P, 128)        # lane-width pad only (<= 127 pixels)
    R = P_pad // 128                 # pixel rows (sublane axis)

    x3 = x_nchw.reshape(N, C, P).astype(jnp.float32)
    if P_pad != P:
        x3 = jnp.pad(x3, ((0, 0), (0, 0), (0, P_pad - P)))
    x4 = x3.reshape(N, C, R, 128)    # free reshape: pixels on sublanes + lanes

    w_oc = weight.reshape(out_ch, C).astype(jnp.float32)   # (2, C) -> SMEM
    b_o = bias.reshape(out_ch).astype(jnp.float32)          # (2,)   -> SMEM

    TR = _choose_rows_per_tile(R, C, out_ch, N, vmem_budget_bytes)
    RC = min(64, TR)                 # vreg-resident sub-chunk (rows)
    grid = (N, pl.cdiv(R, TR))       # ragged last pixel-tile handled by Pallas

    out4 = pl.pallas_call(
        functools.partial(_morph_kernel, rc=RC),
        out_shape=jax.ShapeDtypeStruct((N, out_ch, R, 128), jnp.float32),
        grid_spec=pltpu.PrefetchScalarGridSpec(
            num_scalar_prefetch=0,
            grid=grid,
            in_specs=[
                # Tiny parameters live in SMEM; read as scalars in-kernel.
                pl.BlockSpec(memory_space=pltpu.MemorySpace.SMEM),   # weight (2, C)
                pl.BlockSpec(memory_space=pltpu.MemorySpace.SMEM),   # bias (2,)
                # x tile: batch squeezed, all channels, TR pixel rows x 128 lanes.
                pl.BlockSpec((pl.Squeezed(), C, TR, 128), lambda n, p: (n, 0, p, 0)),
            ],
            out_specs=pl.BlockSpec(
                (pl.Squeezed(), out_ch, TR, 128), lambda n, p: (n, 0, p, 0)
            ),
        ),
        compiler_params=pltpu.CompilerParams(
            dimension_semantics=("parallel", "parallel"),
            vmem_limit_bytes=32 * 1024 * 1024,
        ),
    )(w_oc, b_o, x4)

    # Drop any lane padding (no-op if none) and restore spatial dims.
    return out4.reshape(N, out_ch, P_pad)[:, :, :P].reshape(N, out_ch, H, W)


def _reference(x_nchw, weight, bias):
    # Pure-JAX reference: 1x1 conv == einsum over the channel dim.
    w = weight.reshape(weight.shape[0], weight.shape[1])  # (2, C)
    return jnp.einsum("nchw,oc->nohw", x_nchw, w) + bias[None, :, None, None]


if __name__ == "__main__":
    key = jax.random.PRNGKey(0)
    k_x, k_w, k_b = jax.random.split(key, 3)

    N, C, Hs, Ws = 2, 4, 16, 16          # input_depth = 4
    x = jax.random.normal(k_x, (N, C, Hs, Ws), dtype=jnp.float32)

    # Deterministic parameter init (shapes from nn.Conv2d(input_depth, 2, 1)).
    fan_in = C * 1 * 1
    bound = 1.0 / jnp.sqrt(fan_in)
    weight = jax.random.uniform(k_w, (2, C, 1, 1), jnp.float32, -bound, bound)
    bias = jax.random.uniform(k_b, (2,), jnp.float32, -bound, bound)

    morph_map = morphing_conv2d(x, weight, bias)
    morph_map = jax.block_until_ready(morph_map)

    ref = _reference(x, weight, bias)
    assert morph_map.shape == (N, 2, Hs, Ws)
    assert jnp.allclose(morph_map, ref, atol=1e-5, rtol=1e-5)

    print("KERNEL_OK")
</pallas_src>

<mosaic_0001>
module attributes {stable_mosaic.version = 11 : i64} {
  func.func @_morph_kernel(%arg0: i32, %arg1: i32, %arg2: memref<2x4xf32, #tpu.memory_space<smem>>, %arg3: memref<2xf32, #tpu.memory_space<smem>>, %arg4: memref<1x4x2x128xf32, #tpu.memory_space<vmem>>, %arg5: memref<1x2x2x128xf32, #tpu.memory_space<vmem>>) attributes {dimension_semantics = [#tpu.dimension_semantics<parallel>, #tpu.dimension_semantics<parallel>], iteration_bounds = array<i64: 2, 1>, scalar_prefetch = 0 : i64, scratch_operands = 0 : i64, tpu.core_type = #tpu.core_type<tc>, window_params = [{transform_indices = @transform_0, window_bounds = array<i64: 2, 4>}, {transform_indices = @transform_1, window_bounds = array<i64: 2>}, {transform_indices = @transform_2, window_bounds = array<i64: 1, 4, 2, 128>}, {transform_indices = @transform_3, window_bounds = array<i64: 1, 2, 2, 128>}]} {
    %c0_i32 = arith.constant 0 : i32
    %c2_i32 = arith.constant 2 : i32
    %0 = arith.muli %c0_i32, %c2_i32 : i32
    %1 = tpu.assume_multiple %0, 2 : i32
    %c0 = arith.constant 0 : index
    %c0_0 = arith.constant 0 : index
    %2 = arith.index_cast %1 : i32 to index
    %c0_1 = arith.constant 0 : index
    %3 = vector.load %arg4[%c0, %c0_0, %2, %c0_1] : memref<1x4x2x128xf32, #tpu.memory_space<vmem>>, vector<1x1x2x128xf32>
    %4 = vector.shape_cast %3 : vector<1x1x2x128xf32> to vector<2x128xf32>
    %c0_2 = arith.constant 0 : index
    %c0_3 = arith.constant 0 : index
    %5 = memref.load %arg2[%c0_2, %c0_3] : memref<2x4xf32, #tpu.memory_space<smem>>
    %6 = vector.broadcast %5 : f32 to vector<2x128xf32>
    %7 = arith.mulf %4, %6 : vector<2x128xf32>
    %c0_4 = arith.constant 0 : index
    %8 = memref.load %arg3[%c0_4] : memref<2xf32, #tpu.memory_space<smem>>
    %9 = vector.broadcast %8 : f32 to vector<2x128xf32>
    %10 = arith.addf %7, %9 : vector<2x128xf32>
    %c1 = arith.constant 1 : index
    %c0_5 = arith.constant 0 : index
    %11 = memref.load %arg2[%c1, %c0_5] : memref<2x4xf32, #tpu.memory_space<smem>>
    %12 = vector.broadcast %11 : f32 to vector<2x128xf32>
    %13 = arith.mulf %4, %12 : vector<2x128xf32>
    %c1_6 = arith.constant 1 : index
    %14 = memref.load %arg3[%c1_6] : memref<2xf32, #tpu.memory_space<smem>>
    %15 = vector.broadcast %14 : f32 to vector<2x128xf32>
    %16 = arith.addf %13, %15 : vector<2x128xf32>
    %c0_7 = arith.constant 0 : index
    %c1_8 = arith.constant 1 : index
    %17 = arith.index_cast %1 : i32 to index
    %c0_9 = arith.constant 0 : index
    %18 = vector.load %arg4[%c0_7, %c1_8, %17, %c0_9] : memref<1x4x2x128xf32, #tpu.memory_space<vmem>>, vector<1x1x2x128xf32>
    %19 = vector.shape_cast %18 : vector<1x1x2x128xf32> to vector<2x128xf32>
    %c0_10 = arith.constant 0 : index
    %c1_11 = arith.constant 1 : index
    %20 = memref.load %arg2[%c0_10, %c1_11] : memref<2x4xf32, #tpu.memory_space<smem>>
    %21 = vector.broadcast %20 : f32 to vector<2x128xf32>
    %22 = arith.mulf %19, %21 : vector<2x128xf32>
    %23 = arith.addf %10, %22 : vector<2x128xf32>
    %c1_12 = arith.constant 1 : index
    %c1_13 = arith.constant 1 : index
    %24 = memref.load %arg2[%c1_12, %c1_13] : memref<2x4xf32, #tpu.memory_space<smem>>
    %25 = vector.broadcast %24 : f32 to vector<2x128xf32>
    %26 = arith.mulf %19, %25 : vector<2x128xf32>
    %27 = arith.addf %16, %26 : vector<2x128xf32>
    %c0_14 = arith.constant 0 : index
    %c2 = arith.constant 2 : index
    %28 = arith.index_cast %1 : i32 to index
    %c0_15 = arith.constant 0 : index
    %29 = vector.load %arg4[%c0_14, %c2, %28, %c0_15] : memref<1x4x2x128xf32, #tpu.memory_space<vmem>>, vector<1x1x2x128xf32>
    %30 = vector.shape_cast %29 : vector<1x1x2x128xf32> to vector<2x128xf32>
    %c0_16 = arith.constant 0 : index
    %c2_17 = arith.constant 2 : index
    %31 = memref.load %arg2[%c0_16, %c2_17] : memref<2x4xf32, #tpu.memory_space<smem>>
    %32 = vector.broadcast %31 : f32 to vector<2x128xf32>
    %33 = arith.mulf %30, %32 : vector<2x128xf32>
    %34 = arith.addf %23, %33 : vector<2x128xf32>
    %c1_18 = arith.constant 1 : index
    %c2_19 = arith.constant 2 : index
    %35 = memref.load %arg2[%c1_18, %c2_19] : memref<2x4xf32, #tpu.memory_space<smem>>
    %36 = vector.broadcast %35 : f32 to vector<2x128xf32>
    %37 = arith.mulf %30, %36 : vector<2x128xf32>
    %38 = arith.addf %27, %37 : vector<2x128xf32>
    %c0_20 = arith.constant 0 : index
    %c3 = arith.constant 3 : index
    %39 = arith.index_cast %1 : i32 to index
    %c0_21 = arith.constant 0 : index
    %40 = vector.load %arg4[%c0_20, %c3, %39, %c0_21] : memref<1x4x2x128xf32, #tpu.memory_space<vmem>>, vector<1x1x2x128xf32>
    %41 = vector.shape_cast %40 : vector<1x1x2x128xf32> to vector<2x128xf32>
    %c0_22 = arith.constant 0 : index
    %c3_23 = arith.constant 3 : index
    %42 = memref.load %arg2[%c0_22, %c3_23] : memref<2x4xf32, #tpu.memory_space<smem>>
    %43 = vector.broadcast %42 : f32 to vector<2x128xf32>
    %44 = arith.mulf %41, %43 : vector<2x128xf32>
    %45 = arith.addf %34, %44 : vector<2x128xf32>
    %c1_24 = arith.constant 1 : index
    %c3_25 = arith.constant 3 : index
    %46 = memref.load %arg2[%c1_24, %c3_25] : memref<2x4xf32, #tpu.memory_space<smem>>
    %47 = vector.broadcast %46 : f32 to vector<2x128xf32>
    %48 = arith.mulf %41, %47 : vector<2x128xf32>
    %49 = arith.addf %38, %48 : vector<2x128xf32>
    %c0_26 = arith.constant 0 : index
    %c0_27 = arith.constant 0 : index
    %50 = arith.index_cast %1 : i32 to index
    %c0_28 = arith.constant 0 : index
    %51 = vector.load %arg5[%c0_26, %c0_27, %50, %c0_28] : memref<1x2x2x128xf32, #tpu.memory_space<vmem>>, vector<1x1x2x128xf32>
    %52 = vector.shape_cast %51 : vector<1x1x2x128xf32> to vector<2x128xf32>
    %53 = vector.shape_cast %45 : vector<2x128xf32> to vector<1x1x2x128xf32>
    tpu.vector_store %arg5[%c0_26, %c0_27, %50, %c0_28], %53 {strides = array<i32>} : memref<1x2x2x128xf32, #tpu.memory_space<vmem>>, vector<1x1x2x128xf32>,
    %c0_29 = arith.constant 0 : index
    %c1_30 = arith.constant 1 : index
    %54 = arith.index_cast %1 : i32 to index
    %c0_31 = arith.constant 0 : index
    %55 = vector.load %arg5[%c0_29, %c1_30, %54, %c0_31] : memref<1x2x2x128xf32, #tpu.memory_space<vmem>>, vector<1x1x2x128xf32>
    %56 = vector.shape_cast %55 : vector<1x1x2x128xf32> to vector<2x128xf32>
    %57 = vector.shape_cast %49 : vector<2x128xf32> to vector<1x1x2x128xf32>
    tpu.vector_store %arg5[%c0_29, %c1_30, %54, %c0_31], %57 {strides = array<i32>} : memref<1x2x2x128xf32, #tpu.memory_space<vmem>>, vector<1x1x2x128xf32>,
    %c1_i32 = arith.constant 1 : i32
    return
  }
  func.func @transform_0(%arg0: i32, %arg1: i32) -> (i32, i32) {
    %c0_i32 = arith.constant 0 : i32
    %c0_i32_0 = arith.constant 0 : i32
    %c0_i32_1 = arith.constant 0 : i32
    return %c0_i32, %c0_i32_0 : i32, i32
  }
  func.func @transform_1(%arg0: i32, %arg1: i32) -> i32 {
    %c0_i32 = arith.constant 0 : i32
    %c0_i32_0 = arith.constant 0 : i32
    return %c0_i32 : i32
  }
  func.func @transform_2(%arg0: i32, %arg1: i32) -> (i32, i32, i32, i32) {
    %c0_i32 = arith.constant 0 : i32
    %c0_i32_0 = arith.constant 0 : i32
    %c0_i32_1 = arith.constant 0 : i32
    return %arg0, %c0_i32, %arg1, %c0_i32_0 : i32, i32, i32, i32
  }
  func.func @transform_3(%arg0: i32, %arg1: i32) -> (i32, i32, i32, i32) {
    %c0_i32 = arith.constant 0 : i32
    %c0_i32_0 = arith.constant 0 : i32
    %c0_i32_1 = arith.constant 0 : i32
    return %arg0, %c0_i32, %arg1, %c0_i32_0 : i32, i32, i32, i32
  }
}

</mosaic_0001>

<llo_original>
// kernel: tpu_custom_call.1
$region0: #{tpu_custom_call.1}
  #allocation0 [shape = 'u32[]', space=smem, size = 0x4, offset = 0x4, fixed_abs, tag = 'smem constant byte address 0x4 - core index']
  #allocation1 [shape = 'u32[144,128]{1,0:T(1,128)}', space=vmem, size = 0x12000, scoped, tag = 'internal scratch']
  %s0 = inlined_call_operand.hbm [shape: f32[2,4], index: 0, kind: input, shape index: {}]
  %s1 = inlined_call_operand.vmem [shape: f32[2], index: 1, kind: input, shape index: {}]
  %s2 = inlined_call_operand.hbm [shape: f32[2,4,2,128], index: 2, kind: input, shape index: {}]
  %s3 = inlined_call_operand.hbm [shape: f32[2,2,2,128], index: 3, kind: output, shape index: {}]
  %s4 = sld [smem:[#allocation0]]
  $region57: #{tpu_custom_call.1} parent=0
    _
  %s6 = ssub.s32 1, %s4
  %s7 = scalar_select 0, %s6, %s4
  $region1: #{tpu_custom_call.1} parent=0
    #allocation2 [shape = 'u8[1024]{0}', space=smem, size = 0x400, scoped, tag = 'input window, operand 0, single buffered']
    #allocation3 [shape = 's32[2]{0}', space=sflag, size = 0x8, scoped, tag = 'scoped memory for tpu_custom_call.1']
    #allocation4 [shape = 's32[2]{0}', space=sflag, size = 0x8, scoped, tag = 'scoped memory for tpu_custom_call.1']
    #allocation5 [shape = 's32[2]{0}', space=sflag, size = 0x8, scoped, tag = 'scoped memory for tpu_custom_call.1']
    #allocation6 [shape = 's32[2]{0}', space=sflag, size = 0x8, scoped, tag = 'scoped memory for tpu_custom_call.1']
    #allocation7 [shape = 'u8[512]{0}', space=smem, size = 0x200, scoped, tag = 'input window, operand 1, single buffered']
    #allocation8 [shape = 'u8[8192]{0}', space=vmem, size = 0x2000, scoped, tag = 'input window, operand 2']
    #allocation9 [shape = 'u8[4096]{0}', space=vmem, size = 0x1000, scoped, tag = 'output window, operand 0']
    %8 = vsyncpa [#allocation5], 0
    %9 = vsyncpa [#allocation6], 0
    %10 = vsyncpa [#allocation3], 0
    %s11 = scalar_lea.sflag [#allocation3], 1
    %12 = vsyncpa %s11, 0
    %13 = vsyncpa [#allocation4], 0
    %s14 = scalar_lea.sflag [#allocation4], 1
    %15 = vsyncpa %s14, 0
    loop: start=0, step=1, limit=4
    $region2: #{tpu_custom_call.1} parent=1 // loop_pre_header
      _
    $region3: #{tpu_custom_call.1} parent=1 // loop_header
      %s17 = sphi 0, %s21
      %p18 = scmp.ge.s32.totalorder %s17, 4
      %s24 = sphi 0, %s36
      %s25 = sphi 0, %s32
      %s26 = sphi 0, %s24
      %s27 = sphi 0, %s25
      %s28 = sphi 0, %s26
      %s29 = sphi 0, %s27
      %s37 = sphi 0, %s37
      %s39 = sphi 0, %s37
      %s40 = sphi 0, %s39
      %s54 = sphi 0, %s40
      %s58 = sphi 0, %s58
      %s60 = sphi 0, %s58
      %s61 = sphi 0, %s60
      %s75 = sphi 0, %s61
      %s83 = sphi 0, %s85
      %s86 = sphi 0, %s83
      %s87 = sphi 0, %s86
      %s103 = sphi 0, %s87
      %s111 = sphi 0, %s113
      %s114 = sphi 0, %s111
      %s115 = sphi 0, %s114
      %s131 = sphi 0, %s115
    $region4: #{tpu_custom_call.1} parent=1 // loop_header_branch
      %20 = sbr.rel (%p18) target = $region8
    $region5: #{tpu_custom_call.1} parent=1 // loop_body
      %s22 = ssub.s32 %s17, 1
      %s23 = ssub.s32 %s17, 2
      %s30 = sadd.s32 1, %s25
      %p31 = scmp.ge.s32.totalorder %s30, 1
      %s32 = scalar_select %p31, 0, %s30
      %s33 = sadd.s32 1, %s24
      %s34 = scalar_select %p31, %s33, %s24
      %p35 = scmp.ge.s32.totalorder %s34, 2
      %s36 = scalar_select %p35, 0, %s34
      %s38 = sadd.s32 %s37, 1
      %p41 = scmp.eq.s32.totalorder %s17, 1
      %p42 = scmp.ne.s32.totalorder %s37, %s39
      %p43 = scmp.eq.s32.totalorder %s17, 0
      %p44 = por %p42, %p43
      %p45 = scmp.ne.s32.totalorder %s37, %s39
      %p46 = scmp.eq.s32.totalorder %s22, 1
      %p47 = por %p45, %p46
      %p48 = scmp.ne.s32.totalorder %s39, %s40
      %p49 = scmp.eq.s32.totalorder %s22, 0
      %p50 = por %p48, %p49
      %p51 = scmp.ne.s32.totalorder %s39, %s40
      %p52 = scmp.eq.s32.totalorder %s23, 1
      %p53 = por %p51, %p52
      %p55 = scmp.ne.s32.totalorder %s40, %s54
      %p56 = scmp.eq.s32.totalorder %s23, 0
      %p57 = por %p55, %p56
      %s59 = sadd.s32 %s58, 1
      %p62 = scmp.eq.s32.totalorder %s17, 1
      %p63 = scmp.ne.s32.totalorder %s58, %s60
      %p64 = scmp.eq.s32.totalorder %s17, 0
      %p65 = por %p63, %p64
      %p66 = scmp.ne.s32.totalorder %s58, %s60
      %p67 = scmp.eq.s32.totalorder %s22, 1
      %p68 = por %p66, %p67
      %p69 = scmp.ne.s32.totalorder %s60, %s61
      %p70 = scmp.eq.s32.totalorder %s22, 0
      %p71 = por %p69, %p70
      %p72 = scmp.ne.s32.totalorder %s60, %s61
      %p73 = scmp.eq.s32.totalorder %s23, 1
      %p74 = por %p72, %p73
      %p76 = scmp.ne.s32.totalorder %s61, %s75
      %p77 = scmp.eq.s32.totalorder %s23, 0
      %p78 = por %p76, %p77
      %s79 = ssub.s32 %s24, %s36
      %s80 = ssub.s32 %s25, %s32
      %s81 = sor.u32 %s79, %s80
      %p82 = scmp.eq.s32.totalorder %s81, 0
      %s84 = sadd.s32 %s83, 1
      %s85 = scalar_select %p82, %s83, %s84
      %p88 = pneg %p82
      %p89 = scmp.eq.s32.totalorder %s17, 1
      %p90 = por %p88, %p89
      %p91 = scmp.ne.s32.totalorder %s83, %s86
      %p92 = scmp.eq.s32.totalorder %s17, 0
      %p93 = por %p91, %p92
      %p94 = scmp.ne.s32.totalorder %s83, %s86
      %p95 = scmp.eq.s32.totalorder %s22, 1
      %p96 = por %p94, %p95
      %p97 = scmp.ne.s32.totalorder %s86, %s87
      %p98 = scmp.eq.s32.totalorder %s22, 0
      %p99 = por %p97, %p98
      %p100 = scmp.ne.s32.totalorder %s86, %s87
      %p101 = scmp.eq.s32.totalorder %s23, 1
      %p102 = por %p100, %p101
      %p104 = scmp.ne.s32.totalorder %s87, %s103
      %p105 = scmp.eq.s32.totalorder %s23, 0
      %p106 = por %p104, %p105
      %s107 = ssub.s32 %s24, %s36
      %s108 = ssub.s32 %s25, %s32
      %s109 = sor.u32 %s107, %s108
      %p110 = scmp.eq.s32.totalorder %s109, 0
      %s112 = sadd.s32 %s111, 1
      %s113 = scalar_select %p110, %s111, %s112
      %p116 = pneg %p110
      %p117 = scmp.eq.s32.totalorder %s17, 1
      %p118 = por %p116, %p117
      %p119 = scmp.ne.s32.totalorder %s111, %s114
      %p120 = scmp.eq.s32.totalorder %s17, 0
      %p121 = por %p119, %p120
      %p122 = scmp.ne.s32.totalorder %s111, %s114
      %p123 = scmp.eq.s32.totalorder %s22, 1
      %p124 = por %p122, %p123
      %p125 = scmp.ne.s32.totalorder %s114, %s115
      %p126 = scmp.eq.s32.totalorder %s22, 0
      %p127 = por %p125, %p126
      %p128 = scmp.ne.s32.totalorder %s114, %s115
      %p129 = scmp.eq.s32.totalorder %s23, 1
      %p130 = por %p128, %p129
      %p132 = scmp.ne.s32.totalorder %s115, %s131
      %p133 = scmp.eq.s32.totalorder %s23, 0
      %p134 = por %p132, %p133
      %p135 = scmp.le.s32.totalorder 1, %s17
      %p136 = scmp.lt.s32.totalorder %s17, 3
      %p137 = pnand %p135, %p136
      %p138 = pneg %p137
      // Predicated region
      $region9: #{tpu_custom_call.1} parent=5 // pred_check
        _
      $region10: #{tpu_custom_call.1} parent=5 // pred_check_branch
        %140 = sbr.rel (%p137) target = $region12
      $region11: #{tpu_custom_call.1} parent=5 // pred_region
        %s141 = ssub.s32 %s17, 1
        // Predicated region
        $region13: #{tpu_custom_call.1} parent=11 // pred_check
          %p142 = pneg %p50
        $region14: #{tpu_custom_call.1} parent=11 // pred_check_branch
          %144 = sbr.rel (%p142) target = $region16
        $region15: #{tpu_custom_call.1} parent=11 // pred_region
          %s146 = ssub.s32 32, 32
          %147 = vsyncadd [#allocation5], %s146
          %150 = dma.hbm_to_smem %s0, 32, [#allocation2], [#allocation5]
        $region16: #{tpu_custom_call.1} parent=11 // pred_fallthru
          _
        // Predicated region
        $region17: #{tpu_custom_call.1} parent=11 // pred_check
          %p151 = pneg %p71
        $region18: #{tpu_custom_call.1} parent=11 // pred_check_branch
          %153 = sbr.rel (%p151) target = $region20
        $region19: #{tpu_custom_call.1} parent=11 // pred_region
          %s155 = ssub.s32 16, 16
          %156 = vsyncadd [#allocation6], %s155
          %s158 = sshll.u32 %s1, 4
          %s159 = int_to_ptr.vmem [resolvable:$true] %s158
          %161 = dma.vmem_to_smem %s159, 16, [#allocation7], [#allocation6]
        $region20: #{tpu_custom_call.1} parent=11 // pred_fallthru
          _
      $region12: #{tpu_custom_call.1} parent=5 // pred_fallthru
        _
      %p162 = scmp.lt.s32.totalorder %s17, 2
      // Predicated region
      $region21: #{tpu_custom_call.1} parent=5 // pred_check
        %p163 = pneg %p162
      $region22: #{tpu_custom_call.1} parent=5 // pred_check_branch
        %165 = sbr.rel (%p163) target = $region24
      $region23: #{tpu_custom_call.1} parent=5 // pred_region
        // Predicated region
        $region25: #{tpu_custom_call.1} parent=23 // pred_check
          %p166 = pneg %p93
        $region26: #{tpu_custom_call.1} parent=23 // pred_check_branch
          %168 = sbr.rel (%p166) target = $region28
        $region27: #{tpu_custom_call.1} parent=23 // pred_region
          %s169 = sand.u32 %s83, 1
          %s170 = scalar_lea.sflag [#allocation3], %s169
          %s171 = sand.u32 %s83, 1
          %s172 = smul.addr %s171, 8
          %s173 = scalar_lea.vmem [#allocation8], %s172
          %s175 = ssub.s32 128, 128
          %176 = vsyncadd %s170, %s175
          %s177 = smul.addr %s24, 4
          %s178 = sadd.s32 %s25, %s177
          %s179 = smul.addr %s178, 32
          %s180 = scalar_lea.hbm %s2, %s179
          %s181 = sshll.u32 %s173, 4
          %s182 = int_to_ptr.vmem [resolvable:$true] %s181
          %187 = dma.hbm_to_vmem [thread:$0]  %s180, 128, %s182, %s170, 32, 32, 2
        $region28: #{tpu_custom_call.1} parent=23 // pred_fallthru
          _
      $region24: #{tpu_custom_call.1} parent=5 // pred_fallthru
        _
      %p188 = scmp.le.s32.totalorder 1, %s17
      %p189 = scmp.lt.s32.totalorder %s17, 3
      %p190 = pnand %p188, %p189
      %p191 = pneg %p190
      // Predicated region
      $region29: #{tpu_custom_call.1} parent=5 // pred_check
        _
      $region30: #{tpu_custom_call.1} parent=5 // pred_check_branch
        %193 = sbr.rel (%p190) target = $region32
      $region31: #{tpu_custom_call.1} parent=5 // pred_region
        %s194 = ssub.s32 %s17, 1
        // Predicated region
        $region33: #{tpu_custom_call.1} parent=31 // pred_check
          %p195 = pneg %p50
        $region34: #{tpu_custom_call.1} parent=31 // pred_check_branch
          %197 = sbr.rel (%p195) target = $region36
        $region35: #{tpu_custom_call.1} parent=31 // pred_region
          %198 = dma.done [#allocation5], 32
        $region36: #{tpu_custom_call.1} parent=31 // pred_fallthru
          _
        // Predicated region
        $region37: #{tpu_custom_call.1} parent=31 // pred_check
          %p199 = pneg %p71
        $region38: #{tpu_custom_call.1} parent=31 // pred_check_branch
          %201 = sbr.rel (%p199) target = $region40
        $region39: #{tpu_custom_call.1} parent=31 // pred_region
          %202 = dma.done [#allocation6], 16
        $region40: #{tpu_custom_call.1} parent=31 // pred_fallthru
          _
        %s203 = sand.u32 %s86, 1
        %s204 = scalar_lea.sflag [#allocation3], %s203
        %s205 = sand.u32 %s86, 1
        %s206 = smul.addr %s205, 8
        %s207 = scalar_lea.vmem [#allocation8], %s206
        // Predicated region
        $region41: #{tpu_custom_call.1} parent=31 // pred_check
          %p208 = pneg %p99
        $region42: #{tpu_custom_call.1} parent=31 // pred_check_branch
          %210 = sbr.rel (%p208) target = $region44
        $region43: #{tpu_custom_call.1} parent=31 // pred_region
          %211 = dma.done %s204, 128
        $region44: #{tpu_custom_call.1} parent=31 // pred_fallthru
          _
        %212 = sfence
        %p213 = pneg %p50
        %p214 = pneg %p47
        %p215 = pneg %p71
        %p216 = pneg %p68
        %s217 = sand.u32 %s86, 1
        %s218 = scalar_lea.sflag [#allocation3], %s217
        %s219 = sand.u32 %s86, 1
        %s220 = smul.addr %s219, 8
        %s221 = scalar_lea.vmem [#allocation8], %s220
        %p222 = pneg %p99
        %p223 = pneg %p96
        %p224 = pneg %p127
        %p225 = pneg %p124
        %s226 = sand.u32 %s114, 1
        %s227 = scalar_lea.sflag [#allocation4], %s226
        %s228 = sand.u32 %s114, 1
        %s229 = smul.addr %s228, 4
        %s230 = scalar_lea.vmem [#allocation9], %s229
        %v231 = vld [vmem:[%s207] sm:$0x3]
        %s232 = sld [smem:[#allocation2]]
        %v233 = vstv %s232
        %v234 = vmul.f32 %v231, %v233
        %s235 = sld [smem:[#allocation7]]
        %v236 = vstv %s235
        %v237 = vadd.f32 %v234, %v236
        %s238 = sld [smem:[#allocation2 + $0x80]]
        %v239 = vstv %s238
        %v240 = vmul.f32 %v231, %v239
        %s241 = sld [smem:[#allocation7 + $0x1]]
        %v242 = vstv %s241
        %v243 = vadd.f32 %v240, %v242
        %s244 = sadd.s32 0, 2
        %s245 = scalar_lea.vmem %s207, %s244 [#allocation8]
        %v246 = vld [vmem:[%s245] sm:$0x3]
        %s247 = sld [smem:[#allocation2 + $0x1]]
        %v248 = vstv %s247
        %v249 = vmul.f32 %v246, %v248
        %v250 = vadd.f32 %v237, %v249
        %s251 = sld [smem:[#allocation2 + $0x81]]
        %v252 = vstv %s251
        %v253 = vmul.f32 %v246, %v252
        %v254 = vadd.f32 %v243, %v253
        %s255 = sadd.s32 0, 4
        %s256 = scalar_lea.vmem %s207, %s255 [#allocation8]
        %v257 = vld [vmem:[%s256] sm:$0x3]
        %s258 = sld [smem:[#allocation2 + $0x2]]
        %v259 = vstv %s258
        %v260 = vmul.f32 %v257, %v259
        %v261 = vadd.f32 %v250, %v260
        %s262 = sld [smem:[#allocation2 + $0x82]]
        %v263 = vstv %s262
        %v264 = vmul.f32 %v257, %v263
        %v265 = vadd.f32 %v254, %v264
        %s266 = sadd.s32 0, 6
        %s267 = scalar_lea.vmem %s207, %s266 [#allocation8]
        %v268 = vld [vmem:[%s267] sm:$0x3]
        %s269 = sld [smem:[#allocation2 + $0x3]]
        %v270 = vstv %s269
        %v271 = vmul.f32 %v268, %v270
        %v272 = vadd.f32 %v261, %v271
        %s273 = sld [smem:[#allocation2 + $0x83]]
        %v274 = vstv %s273
        %v275 = vmul.f32 %v268, %v274
        %v276 = vadd.f32 %v265, %v275
        %277 = vst [vmem:[%s230] sm:$0x3] %v272
        %s278 = scalar_lea.vmem %s230, %s244 [#allocation9]
        %279 = vst [vmem:[%s278] sm:$0x3] %v276
        %s280 = sand.u32 %s114, 1
        %s281 = scalar_lea.sflag [#allocation4], %s280
        %s282 = sand.u32 %s114, 1
        %s283 = smul.addr %s282, 4
        %s284 = scalar_lea.vmem [#allocation9], %s283
        // Predicated region
        $region45: #{tpu_custom_call.1} parent=31 // pred_check
          %p285 = pneg %p124
        $region46: #{tpu_custom_call.1} parent=31 // pred_check_branch
          %287 = sbr.rel (%p285) target = $region48
        $region47: #{tpu_custom_call.1} parent=31 // pred_region
          %s289 = ssub.s32 64, 64
          %290 = vsyncadd %s281, %s289
          %s291 = smul.addr %s26, 2
          %s292 = sadd.s32 %s27, %s291
          %s293 = smul.addr %s292, 32
          %s294 = scalar_lea.hbm %s3, %s293
          %s295 = sshll.u32 %s284, 4
          %s296 = int_to_ptr.vmem [resolvable:$true] %s295
          %301 = dma.vmem_to_hbm [thread:$0]  %s296, 64, %s294, %s281, 32, 32, 2
        $region48: #{tpu_custom_call.1} parent=31 // pred_fallthru
          _
      $region32: #{tpu_custom_call.1} parent=5 // pred_fallthru
        _
      %p302 = scmp.le.s32.totalorder 2, %s17
      // Predicated region
      $region49: #{tpu_custom_call.1} parent=5 // pred_check
        %p303 = pneg %p302
      $region50: #{tpu_custom_call.1} parent=5 // pred_check_branch
        %305 = sbr.rel (%p303) target = $region52
      $region51: #{tpu_custom_call.1} parent=5 // pred_region
        %s306 = ssub.s32 %s17, 2
        // Predicated region
        $region53: #{tpu_custom_call.1} parent=51 // pred_check
          %p307 = pneg %p130
        $region54: #{tpu_custom_call.1} parent=51 // pred_check_branch
          %309 = sbr.rel (%p307) target = $region56
        $region55: #{tpu_custom_call.1} parent=51 // pred_region
          %s310 = sand.u32 %s115, 1
          %s311 = scalar_lea.sflag [#allocation4], %s310
          %s312 = sand.u32 %s115, 1
          %s313 = smul.addr %s312, 4
          %s314 = scalar_lea.vmem [#allocation9], %s313
          %315 = dma.done %s311, 64
        $region56: #{tpu_custom_call.1} parent=51 // pred_fallthru
          _
      $region52: #{tpu_custom_call.1} parent=5 // pred_fallthru
        _
    $region6: #{tpu_custom_call.1} parent=1 // loop_footer
      %s21 = sadd.s32 1, %s17
    $region7: #{tpu_custom_call.1} parent=1 // loop_footer_branch
      %16 = sbr.rel target = $region3
    $region8: #{tpu_custom_call.1} parent=1 // loop_exit
      _
    %316 = vsyncpa [#allocation3], 1
    %s317 = scalar_lea.sflag [#allocation3], 1
    %318 = vsyncpa %s317, 1
    %319 = vsyncpa [#allocation4], 1
    %s320 = scalar_lea.sflag [#allocation4], 1
    %321 = vsyncpa %s320, 1
    %322 = vsyncpa [#allocation5], 1
    %s323 = scalar_lea.sflag [#allocation5], 1
    %324 = vsyncpa %s323, 1
    %325 = vsyncpa [#allocation6], 1
    %s326 = scalar_lea.sflag [#allocation6], 1
    %327 = vsyncpa %s326, 1

</llo_original>
